<compile_context>
chip_gen: v7x
topology: tpu7x:2x2x1
jax: 0.10.0
libtpu: 0.0.40
codegen_flags: <defaults>
</compile_context>

<pallas_src>
import functools

import jax
import jax.numpy as jnp
from jax.experimental import pallas as pl
from jax.experimental.pallas import tpu as pltpu

_LANE = 128
_SUBLANE = 8


# ----------------------------------------------------------------------------
# Pallas kernel: out = clip(x, lower, upper)  (elementwise, VPU only)
# ----------------------------------------------------------------------------
def _trelu_kernel(x_ref, o_ref, *, lower, upper):
    # lower/upper are Python floats -> compile-time literals, no capture.
    x = x_ref[...]
    o_ref[...] = jnp.minimum(jnp.maximum(x, lower), upper)


def _choose_row_tile(m_rows, max_rows=1024):
    """Pick a row tile (multiple of 8) that keeps the grid >= 2 when possible."""
    tm = min(max_rows, m_rows)
    if m_rows >= 2 * _SUBLANE and pl.cdiv(m_rows, tm) < 2:
        # Split into (at least) two tiles so v7x's 2 TensorCores both get work.
        tm = max(_SUBLANE, ((m_rows // 2) // _SUBLANE) * _SUBLANE)
    return tm


# ----------------------------------------------------------------------------
# Wrapper: flatten to a lane-dense 2D view, tile over rows, restore shape.
# ----------------------------------------------------------------------------
def trelu(x, lower=0.0, upper=1.0, *, max_rows=1024):
    orig_shape = x.shape
    orig_dtype = x.dtype

    flat = x.reshape(-1)
    size = flat.shape[0]

    # Pad the flat view up to a whole number of (8, 128) vregs.
    vreg = _SUBLANE * _LANE
    m_rows = pl.cdiv(size, vreg) * _SUBLANE          # rows of 128, multiple of 8
    total = m_rows * _LANE
    if total != size:
        flat = jnp.pad(flat, (0, total - size))
    x2d = flat.reshape(m_rows, _LANE)

    # Row tiling.
    tm = _choose_row_tile(m_rows, max_rows)
    n_tiles = pl.cdiv(m_rows, tm)
    m_padded = n_tiles * tm
    if m_padded != m_rows:
        x2d = jnp.pad(x2d, ((0, m_padded - m_rows), (0, 0)))

    kernel = functools.partial(_trelu_kernel,
                               lower=float(lower),
                               upper=float(upper))

    out2d = pl.pallas_call(
        kernel,
        out_shape=jax.ShapeDtypeStruct((m_padded, _LANE), orig_dtype),
        grid_spec=pltpu.PrefetchScalarGridSpec(
            num_scalar_prefetch=0,
            grid=(n_tiles,),
            in_specs=[pl.BlockSpec((tm, _LANE), lambda i: (i, 0))],
            out_specs=pl.BlockSpec((tm, _LANE), lambda i: (i, 0)),
        ),
        compiler_params=pltpu.CompilerParams(
            dimension_semantics=("parallel",)),
    )(x2d)

    return out2d.reshape(-1)[:size].reshape(orig_shape)


# ----------------------------------------------------------------------------
# Module-equivalent forward
# ----------------------------------------------------------------------------
def trelu_forward(x, *, lower=0.0, upper=1.0):
    return trelu(x, lower, upper)


# ----------------------------------------------------------------------------
# Pure-JAX reference (for correctness check)
# ----------------------------------------------------------------------------
def _ref_forward(x, *, lower=0.0, upper=1.0):
    return jnp.clip(x, lower, upper)


if __name__ == "__main__":
    B, C, H, W = 2, 4, 16, 16
    lower, upper = 0.0, 1.0

    key = jax.random.PRNGKey(0)
    # Scale inputs so a meaningful fraction lands outside [0, 1] on both sides.
    x = 2.0 * jax.random.normal(key, (B, C, H, W), jnp.float32)

    fwd = jax.jit(functools.partial(trelu_forward, lower=lower, upper=upper))
    out = fwd(x)
    out = jax.block_until_ready(out)

    ref = _ref_forward(x, lower=lower, upper=upper)
    assert out.shape == x.shape, out.shape
    assert out.dtype == x.dtype, out.dtype
    assert jnp.allclose(out, ref, rtol=0.0, atol=0.0), "mismatch vs reference"

    print("KERNEL_OK")
</pallas_src>

<mosaic_0001>
module attributes {stable_mosaic.version = 11 : i64} {
  func.func @_trelu_kernel(%arg0: i32, %arg1: memref<8x128xf32, #tpu.memory_space<vmem>>, %arg2: memref<8x128xf32, #tpu.memory_space<vmem>>) attributes {dimension_semantics = [#tpu.dimension_semantics<parallel>], iteration_bounds = array<i64: 2>, scalar_prefetch = 0 : i64, scratch_operands = 0 : i64, tpu.core_type = #tpu.core_type<tc>, window_params = [{transform_indices = @transform_0, window_bounds = array<i64: 8, 128>}, {transform_indices = @transform_1, window_bounds = array<i64: 8, 128>}]} {
    %c0 = arith.constant 0 : index
    %c0_0 = arith.constant 0 : index
    %0 = vector.load %arg1[%c0, %c0_0] : memref<8x128xf32, #tpu.memory_space<vmem>>, vector<8x128xf32>
    %cst = arith.constant 0.000000e+00 : f32
    %1 = vector.broadcast %cst : f32 to vector<8x128xf32>
    %2 = arith.maximumf %0, %1 : vector<8x128xf32>
    %cst_1 = arith.constant 1.000000e+00 : f32
    %3 = vector.broadcast %cst_1 : f32 to vector<8x128xf32>
    %4 = arith.minimumf %2, %3 : vector<8x128xf32>
    %c0_2 = arith.constant 0 : index
    %c0_3 = arith.constant 0 : index
    %5 = vector.load %arg2[%c0_2, %c0_3] : memref<8x128xf32, #tpu.memory_space<vmem>>, vector<8x128xf32>
    tpu.vector_store %arg2[%c0_2, %c0_3], %4 {strides = array<i32>} : memref<8x128xf32, #tpu.memory_space<vmem>>, vector<8x128xf32>,
    return
  }
  func.func @transform_0(%arg0: i32) -> (i32, i32) {
    %c0_i32 = arith.constant 0 : i32
    %c0_i32_0 = arith.constant 0 : i32
    return %arg0, %c0_i32 : i32, i32
  }
  func.func @transform_1(%arg0: i32) -> (i32, i32) {
    %c0_i32 = arith.constant 0 : i32
    %c0_i32_0 = arith.constant 0 : i32
    return %arg0, %c0_i32 : i32, i32
  }
}

</mosaic_0001>

<llo_original>
// kernel: trelu_forward.1
$region0: #{trelu_forward.1}
  #allocation0 [shape = 'u32[]', space=smem, size = 0x4, offset = 0x4, fixed_abs, tag = 'smem constant byte address 0x4 - core index']
  #allocation1 [shape = 'u32[144,128]{1,0:T(1,128)}', space=vmem, size = 0x12000, scoped, tag = 'internal scratch']
  %s0 = inlined_call_operand.vmem [shape: f32[16,128], index: 0, kind: input, shape index: {}]
  %s1 = inlined_call_operand.vmem [shape: f32[16,128], index: 1, kind: output, shape index: {}]
  %s2 = sld [smem:[#allocation0]]
  $region37: #{trelu_forward.1} parent=0
    _
  %s4 = ssub.s32 1, %s2
  %s5 = scalar_select 0, %s4, %s2
  loop: start=0, step=1, limit=4
  $region2: #{trelu_forward.1} parent=0 // loop_pre_header
    _
  $region3: #{trelu_forward.1} parent=0 // loop_header
    %s7 = sphi 0, %s11
    %p8 = scmp.ge.s32.totalorder %s7, 4
    %s17 = sphi 0, %s19
    %s20 = sphi 0, %s17
    %s21 = sphi 0, %s20
    %s37 = sphi 0, %s21
    %s43 = sphi 0, %s45
    %s46 = sphi 0, %s43
    %s47 = sphi 0, %s46
    %s63 = sphi 0, %s47
  $region4: #{trelu_forward.1} parent=0 // loop_header_branch
    %10 = sbr.rel (%p8) target = $region8
  $region5: #{trelu_forward.1} parent=0 // loop_body
    %s12 = ssub.s32 %s7, 1
    %s13 = ssub.s32 %s7, 2
    %s14 = sadd.s32 %s7, 1
    %s15 = ssub.s32 %s7, %s14
    %p16 = scmp.eq.s32.totalorder %s15, 0
    %s18 = sadd.s32 %s17, 1
    %s19 = scalar_select %p16, %s17, %s18
    %p22 = pneg %p16
    %p23 = scmp.eq.s32.totalorder %s7, 1
    %p24 = por %p22, %p23
    %p25 = scmp.ne.s32.totalorder %s17, %s20
    %p26 = scmp.eq.s32.totalorder %s7, 0
    %p27 = por %p25, %p26
    %p28 = scmp.ne.s32.totalorder %s17, %s20
    %p29 = scmp.eq.s32.totalorder %s12, 1
    %p30 = por %p28, %p29
    %p31 = scmp.ne.s32.totalorder %s20, %s21
    %p32 = scmp.eq.s32.totalorder %s12, 0
    %p33 = por %p31, %p32
    %p34 = scmp.ne.s32.totalorder %s20, %s21
    %p35 = scmp.eq.s32.totalorder %s13, 1
    %p36 = por %p34, %p35
    %p38 = scmp.ne.s32.totalorder %s21, %s37
    %p39 = scmp.eq.s32.totalorder %s13, 0
    %p40 = por %p38, %p39
    %s41 = ssub.s32 %s7, %s14
    %p42 = scmp.eq.s32.totalorder %s41, 0
    %s44 = sadd.s32 %s43, 1
    %s45 = scalar_select %p42, %s43, %s44
    %p48 = pneg %p42
    %p49 = scmp.eq.s32.totalorder %s7, 1
    %p50 = por %p48, %p49
    %p51 = scmp.ne.s32.totalorder %s43, %s46
    %p52 = scmp.eq.s32.totalorder %s7, 0
    %p53 = por %p51, %p52
    %p54 = scmp.ne.s32.totalorder %s43, %s46
    %p55 = scmp.eq.s32.totalorder %s12, 1
    %p56 = por %p54, %p55
    %p57 = scmp.ne.s32.totalorder %s46, %s47
    %p58 = scmp.eq.s32.totalorder %s12, 0
    %p59 = por %p57, %p58
    %p60 = scmp.ne.s32.totalorder %s46, %s47
    %p61 = scmp.eq.s32.totalorder %s13, 1
    %p62 = por %p60, %p61
    %p64 = scmp.ne.s32.totalorder %s47, %s63
    %p65 = scmp.eq.s32.totalorder %s13, 0
    %p66 = por %p64, %p65
    %p67 = scmp.le.s32.totalorder 1, %s7
    %p68 = scmp.lt.s32.totalorder %s7, 3
    %p69 = pnand %p67, %p68
    %p70 = pneg %p69
    // Predicated region
    $region9: #{trelu_forward.1} parent=5 // pred_check
      _
    $region10: #{trelu_forward.1} parent=5 // pred_check_branch
      %72 = sbr.rel (%p69) target = $region12
    $region11: #{trelu_forward.1} parent=5 // pred_region
      %s73 = ssub.s32 %s7, 1
    $region12: #{trelu_forward.1} parent=5 // pred_fallthru
      _
    %p74 = scmp.lt.s32.totalorder %s7, 2
    // Predicated region
    $region13: #{trelu_forward.1} parent=5 // pred_check
      %p75 = pneg %p74
    $region14: #{trelu_forward.1} parent=5 // pred_check_branch
      %77 = sbr.rel (%p75) target = $region16
    $region15: #{trelu_forward.1} parent=5 // pred_region
      // Predicated region
      $region17: #{trelu_forward.1} parent=15 // pred_check
        %p78 = pneg %p27
      $region18: #{trelu_forward.1} parent=15 // pred_check_branch
        %80 = sbr.rel (%p78) target = $region20
      $region19: #{trelu_forward.1} parent=15 // pred_region
        %p81 = scmp.lt.s32.totalorder %s7, 1
        %s82 = scalar_select %p81, %s7, 1
        %s83 = smul.addr %s82, 8
        %s84 = scalar_lea.vmem %s0, %s83
      $region20: #{trelu_forward.1} parent=15 // pred_fallthru
        _
    $region16: #{trelu_forward.1} parent=5 // pred_fallthru
      _
    %p85 = scmp.le.s32.totalorder 1, %s7
    %p86 = scmp.lt.s32.totalorder %s7, 3
    %p87 = pnand %p85, %p86
    %p88 = pneg %p87
    // Predicated region
    $region21: #{trelu_forward.1} parent=5 // pred_check
      _
    $region22: #{trelu_forward.1} parent=5 // pred_check_branch
      %90 = sbr.rel (%p87) target = $region24
    $region23: #{trelu_forward.1} parent=5 // pred_region
      %s91 = ssub.s32 %s7, 1
      %p92 = scmp.lt.s32.totalorder %s12, 1
      %s93 = scalar_select %p92, %s12, 1
      %s94 = smul.addr %s93, 8
      %s95 = scalar_lea.vmem %s0, %s94
      %p96 = pneg %p33
      %p97 = pneg %p30
      %p98 = pneg %p59
      %p99 = pneg %p56
      %p100 = scmp.lt.s32.totalorder %s12, 1
      %s101 = scalar_select %p100, %s12, 1
      %s102 = smul.addr %s101, 8
      %s103 = scalar_lea.vmem %s1, %s102
      %p104 = scmp.lt.s32.totalorder %s12, 1
      %s105 = scalar_select %p104, %s12, 1
      %s106 = smul.addr %s105, 8
      %s107 = scalar_lea.vmem %s0, %s106
      %p108 = scmp.lt.s32.totalorder %s12, 1
      %s109 = scalar_select %p108, %s12, 1
      %s110 = smul.addr %s109, 8
      %s111 = scalar_lea.vmem %s1, %s110
      %v112 = vld [vmem:[%s107] sm:$0xff]
      %v113 = vmax.f32 %v112, 0.0
      %v114 = vmin.f32 %v113, 1.0
      %115 = vst [vmem:[%s111] sm:$0xff] %v114
      %p116 = scmp.lt.s32.totalorder %s12, 1
      %s117 = scalar_select %p116, %s12, 1
      %s118 = smul.addr %s117, 8
      %s119 = scalar_lea.vmem %s1, %s118
      // Predicated region
      $region25: #{trelu_forward.1} parent=23 // pred_check
        %p120 = pneg %p56
      $region26: #{trelu_forward.1} parent=23 // pred_check_branch
        %122 = sbr.rel (%p120) target = $region28
      $region27: #{trelu_forward.1} parent=23 // pred_region
        _
      $region28: #{trelu_forward.1} parent=23 // pred_fallthru
        _
    $region24: #{trelu_forward.1} parent=5 // pred_fallthru
      _
    %p123 = scmp.le.s32.totalorder 2, %s7
    // Predicated region
    $region29: #{trelu_forward.1} parent=5 // pred_check
      %p124 = pneg %p123
    $region30: #{trelu_forward.1} parent=5 // pred_check_branch
      %126 = sbr.rel (%p124) target = $region32
    $region31: #{trelu_forward.1} parent=5 // pred_region
      %s127 = ssub.s32 %s7, 2
      // Predicated region
      $region33: #{trelu_forward.1} parent=31 // pred_check
        %p128 = pneg %p62
      $region34: #{trelu_forward.1} parent=31 // pred_check_branch
        %130 = sbr.rel (%p128) target = $region36
      $region35: #{trelu_forward.1} parent=31 // pred_region
        %p131 = scmp.lt.s32.totalorder %s13, 1
        %s132 = scalar_select %p131, %s13, 1
        %s133 = smul.addr %s132, 8
        %s134 = scalar_lea.vmem %s1, %s133
      $region36: #{trelu_forward.1} parent=31 // pred_fallthru
        _
    $region32: #{trelu_forward.1} parent=5 // pred_fallthru
      _
  $region6: #{trelu_forward.1} parent=0 // loop_footer
    %s11 = sadd.s32 1, %s7
  $region7: #{trelu_forward.1} parent=0 // loop_footer_branch
    %6 = sbr.rel target = $region3
  $region8: #{trelu_forward.1} parent=0 // loop_exit
    _

</llo_original>
